<compile_context>
chip_gen: v6e
topology: v6e:2x2x1
jax: 0.10.0
libtpu: 0.0.40
codegen_flags: <defaults>
</compile_context>

<pallas_src>
import functools

import jax
import jax.numpy as jnp
from jax.experimental import pallas as pl
from jax.experimental.pallas import tpu as pltpu
from jax.scipy.linalg import solve_triangular


def _soocc_kernel(mx_ref, mp_ref, bias_ref, x_ref, p_ref, o_ref):
    """out^T tile = Mx^T @ x^T + Mp^T @ parms^T + bias   (batch on the lane axis).

    mx_ref   (n, n)   folded x-side map        (resident constant)
    mp_ref   (n, p)   folded parms-side map    (resident constant)
    bias_ref (n, 1)   folded constant offset   (resident constant)
    x_ref    (n, TB)  x^T tile
    p_ref    (p, TB)  parms^T tile
    o_ref    (n, TB)  out^T tile (lane-dense)
    """
    acc = jnp.dot(mx_ref[...], x_ref[...], preferred_element_type=jnp.float32)
    acc = acc + jnp.dot(mp_ref[...], p_ref[...], preferred_element_type=jnp.float32)
    o_ref[...] = (acc + bias_ref[...]).astype(o_ref.dtype)


def _is_v7x():
    try:
        return "v7" in jax.devices()[0].device_kind.lower()
    except Exception:
        return False


def _pick_tb(batch, tb_req, *, split_for_megacore=False):
    """Largest lane tile <= tb_req that divides B and is a multiple of 128 (or the whole
    batch). Only split the grid in two when both v7x TensorCores get >=1024 rows each."""
    tb_req = max(1, min(int(tb_req), batch))
    if split_for_megacore and batch >= 2048 and (batch // 2) % 128 == 0:
        tb_req = min(tb_req, batch // 2)
    for tb in range(tb_req, 0, -1):
        if batch % tb == 0 and (tb % 128 == 0 or tb == batch):
            return tb
    return batch


def second_order_prox(x, parms, A, Bp, c, Qf, Wp, *, gamma=2.0, tb=4096, interpret=False):
    """Prox of f(x) + i_{F(x)=0} (second-order approximation), JF_fixed=True path.

    x: (B, n), parms: (B, p), A: (m, n), Bp: (m, p), c: (m,), Qf: (n, n), Wp: (p, n).
    Returns (B, n) with x.dtype.
    """
    B, n = x.shape
    _, p = parms.shape
    m = A.shape[0]
    assert m < n, "constraint count m must be < n (complete-QR null space must be nonempty)"
    f32 = jnp.float32

    # ---- constant precompute (== module __init__ with JF_fixed=True + analytic autodiff) ----
    A = A.astype(f32)
    Bp = Bp.astype(f32)
    c = c.astype(f32)
    Wp = Wp.astype(f32)
    Qs = 0.5 * (Qf.astype(f32) + Qf.astype(f32).T)     # hess_x f (constant for quadratic f)
    Q, Rfull = jnp.linalg.qr(A.T, mode="complete")     # Q (n,n), Rfull (n,m)
    R, Qr, Qn = Rfull[:m, :], Q[:, :m], Q[:, m:]
    Md = (gamma / 2.0) * jnp.eye(n, dtype=f32) + Qs
    QTMdQ = Qn.T @ Md @ Qn
    zmap = jnp.linalg.solve(R, Qr.T)                   # (m, n) = R^{-1} Qr^T
    nmap = Qn @ jnp.linalg.solve(QTMdQ.T, Qn.T)        # (n, n) = Qn (Qn^T Md Qn)^{-T} Qn^T

    # Fold the whole forward (b -> zeta -> Md/grad -> null-space solve -> out) into
    #   out = x @ Mx + parms @ Mp + bias
    # Affine F means b = -F(x) + JFx x = -(Bp p + c): the A x term cancels exactly, so no
    # A^T matmul survives the fold.
    Zp = -(Bp.T @ zmap)                                          # (p, n)  parms -> zeta
    z0 = (-(c @ zmap))[None, :]                                  # (1, n)  const -> zeta
    Mx = (Md - (gamma / 2.0) * Qs) @ nmap                        # (n, n)
    Mp = Zp - Zp @ Md @ nmap - (gamma / 2.0) * (Wp @ nmap)       # (p, n)
    bias = z0 - z0 @ Md @ nmap                                   # (1, n)
    # TODO(synk): if f has an x-dependent Hessian or JF_fixed=False, the per-batch QR and the
    # (n-m)x(n-m) linear solve have no Pallas primitive and this affine fold no longer applies.

    # ---- lane-dense orientation: batch on the lane axis, constants left-multiply ----
    mxT = Mx.T                                                   # (n, n)
    mpT = Mp.T                                                   # (n, p)
    biasT = bias.T                                               # (n, 1)
    xT = x.T                                                     # (n, B)
    pT = parms.T                                                 # (p, B)

    tb = _pick_tb(B, tb, split_for_megacore=_is_v7x())
    grid = (B // tb,)

    flops = 2 * B * n * (n + p) + B * n
    bytes_accessed = 4 * (B * (2 * n + p) + n * n + n * p + n)

    out_t = pl.pallas_call(
        _soocc_kernel,
        out_shape=jax.ShapeDtypeStruct((n, B), x.dtype),
        grid=grid,
        in_specs=[
            pl.BlockSpec((n, n), lambda i: (0, 0)),      # Mx^T   (resident)
            pl.BlockSpec((n, p), lambda i: (0, 0)),      # Mp^T   (resident)
            pl.BlockSpec((n, 1), lambda i: (0, 0)),      # bias   (resident)
            pl.BlockSpec((n, tb), lambda i: (0, i)),     # x^T tile
            pl.BlockSpec((p, tb), lambda i: (0, i)),     # parms^T tile
        ],
        out_specs=pl.BlockSpec((n, tb), lambda i: (0, i)),
        compiler_params=pltpu.CompilerParams(dimension_semantics=("parallel",)),
        cost_estimate=pl.CostEstimate(flops=int(flops), transcendentals=0,
                                      bytes_accessed=int(bytes_accessed)),
        interpret=interpret,
    )(mxT, mpT, biasT, xT, pT)

    return out_t.T


def _reference_forward(x, parms, A, Bp, c, Qf, Wp, gamma=2.0):
    """Pure-JAX mirror of the PyTorch forward (JF_fixed=True), using jax autodiff of the
    synthetic f, F exactly as the torch module uses torch.func."""
    def f(xv, pv):
        return 0.5 * xv @ Qf @ xv + (pv @ Wp) @ xv

    def F(xv, pv):
        return A @ xv + Bp @ pv + c

    B, n = x.shape
    m = A.shape[0]
    pdim = parms.shape[1]

    # JF_fixed=True: Jacobian and QR computed once at (0, 0)
    JFx = jax.jacrev(F, argnums=0)(jnp.zeros((n,), x.dtype), jnp.zeros((pdim,), x.dtype))
    Q, Rfull = jnp.linalg.qr(JFx.T, mode="complete")
    R, Qr, Qn = Rfull[:m, :], Q[:, :m], Q[:, m:]

    Fx = jax.vmap(F)(x, parms)                                  # (B, m)
    fg = jax.vmap(jax.grad(f, argnums=0))(x, parms)             # (B, n)
    Hf = jax.vmap(jax.hessian(f, argnums=0))(x, parms)          # (B, n, n)

    b = -Fx + jnp.einsum("mn,bn->bm", JFx, x)                   # (B, m)
    zeta_r = solve_triangular(R.T, b.T, lower=True).T           # (B, m)
    zeta = zeta_r @ Qr.T                                        # (B, n)

    Md = (gamma / 2.0) * jnp.eye(n, dtype=x.dtype)[None] + Hf   # (B, n, n)
    QTMdQ = jnp.einsum("nk,bnl,lj->bkj", Qn, Md, Qn)            # (B, n-m, n-m)
    zq = jnp.einsum("bnl,bl->bn", Md, x - zeta) - (gamma / 2.0) * fg
    zq = jnp.einsum("nk,bn->bk", Qn, zq)                        # (B, n-m)
    zq = jnp.linalg.solve(QTMdQ, zq[..., None])[..., 0]         # (B, n-m)
    zq = zq @ Qn.T                                              # (B, n)
    return zq + zeta


if __name__ == "__main__":
    key = jax.random.PRNGKey(0)
    kx, kp, ka, kb, kc, kq, kw = jax.random.split(key, 7)

    B, n, m, p = 8, 32, 8, 16   # batch, x dim, constraint count (m < n), parm dim

    x = jax.random.normal(kx, (B, n), dtype=jnp.float32)
    parms = jax.random.normal(kp, (B, p), dtype=jnp.float32)

    # Deterministic synthetic parameters of the affine constraint F and quadratic objective f.
    A = jax.random.normal(ka, (m, n), dtype=jnp.float32) / jnp.sqrt(float(n))
    Bp = jax.random.normal(kb, (m, p), dtype=jnp.float32) / jnp.sqrt(float(p))
    c = jax.random.normal(kc, (m,), dtype=jnp.float32) * 0.1
    G = jax.random.normal(kq, (n, n), dtype=jnp.float32) / jnp.sqrt(float(n))
    Qf = 0.5 * (G @ G.T)                                     # PSD -> convex quadratic objective
    Wp = jax.random.normal(kw, (p, n), dtype=jnp.float32) * 0.1

    out = second_order_prox(x, parms, A, Bp, c, Qf, Wp)
    out = jax.block_until_ready(out)

    ref = _reference_forward(x, parms, A, Bp, c, Qf, Wp)
    ref = jax.block_until_ready(ref)

    assert out.shape == (B, n) and out.dtype == x.dtype
    assert jnp.allclose(out, ref, atol=1e-3, rtol=1e-3), float(jnp.max(jnp.abs(out - ref)))
    print("KERNEL_OK")
</pallas_src>

<mosaic_0001>
module attributes {stable_mosaic.version = 11 : i64} {
  func.func @_soocc_kernel(%arg0: i32, %arg1: memref<32x32xf32, #tpu.memory_space<vmem>>, %arg2: memref<32x16xf32, #tpu.memory_space<vmem>>, %arg3: memref<32x1xf32, #tpu.memory_space<vmem>>, %arg4: memref<32x8xf32, #tpu.memory_space<vmem>>, %arg5: memref<16x8xf32, #tpu.memory_space<vmem>>, %arg6: memref<32x8xf32, #tpu.memory_space<vmem>>) attributes {dimension_semantics = [#tpu.dimension_semantics<parallel>], iteration_bounds = array<i64: 1>, scalar_prefetch = 0 : i64, scratch_operands = 0 : i64, tpu.core_type = #tpu.core_type<tc>, window_params = [{pipeline_mode = #tpu.pipeline_mode<synchronous>, transform_indices = @transform_0, window_bounds = array<i64: 32, 32>}, {pipeline_mode = #tpu.pipeline_mode<synchronous>, transform_indices = @transform_1, window_bounds = array<i64: 32, 16>}, {pipeline_mode = #tpu.pipeline_mode<synchronous>, transform_indices = @transform_2, window_bounds = array<i64: 32, 1>}, {transform_indices = @transform_3, window_bounds = array<i64: 32, 8>}, {transform_indices = @transform_4, window_bounds = array<i64: 16, 8>}, {transform_indices = @transform_5, window_bounds = array<i64: 32, 8>}]} {
    %c0 = arith.constant 0 : index
    %c0_0 = arith.constant 0 : index
    %0 = vector.load %arg1[%c0, %c0_0] : memref<32x32xf32, #tpu.memory_space<vmem>>, vector<32x32xf32>
    %c0_1 = arith.constant 0 : index
    %c0_2 = arith.constant 0 : index
    %1 = vector.load %arg4[%c0_1, %c0_2] : memref<32x8xf32, #tpu.memory_space<vmem>>, vector<32x8xf32>
    %cst = arith.constant dense<0.000000e+00> : vector<32x8xf32>
    %2 = tpu.matmul %0, %1, %cst {dimension_numbers = #tpu.dot_dimension_numbers<[1], [0], [0], [1], [0, 0, 1, 1], [], []>} : vector<32x32xf32>, vector<32x8xf32>, vector<32x8xf32> -> vector<32x8xf32>
    %c0_3 = arith.constant 0 : index
    %c0_4 = arith.constant 0 : index
    %3 = vector.load %arg2[%c0_3, %c0_4] : memref<32x16xf32, #tpu.memory_space<vmem>>, vector<32x16xf32>
    %c0_5 = arith.constant 0 : index
    %c0_6 = arith.constant 0 : index
    %4 = vector.load %arg5[%c0_5, %c0_6] : memref<16x8xf32, #tpu.memory_space<vmem>>, vector<16x8xf32>
    %cst_7 = arith.constant dense<0.000000e+00> : vector<32x8xf32>
    %5 = tpu.matmul %3, %4, %cst_7 {dimension_numbers = #tpu.dot_dimension_numbers<[1], [0], [0], [1], [0, 0, 1, 1], [], []>} : vector<32x16xf32>, vector<16x8xf32>, vector<32x8xf32> -> vector<32x8xf32>
    %6 = arith.addf %2, %5 : vector<32x8xf32>
    %c0_8 = arith.constant 0 : index
    %c0_9 = arith.constant 0 : index
    %7 = vector.load %arg3[%c0_8, %c0_9] : memref<32x1xf32, #tpu.memory_space<vmem>>, vector<32x1xf32>
    %8 = vector.broadcast %7 : vector<32x1xf32> to vector<32x8xf32>
    %9 = arith.addf %6, %8 : vector<32x8xf32>
    %c0_10 = arith.constant 0 : index
    %c0_11 = arith.constant 0 : index
    %10 = vector.load %arg6[%c0_10, %c0_11] : memref<32x8xf32, #tpu.memory_space<vmem>>, vector<32x8xf32>
    tpu.vector_store %arg6[%c0_10, %c0_11], %9 {strides = array<i32>} : memref<32x8xf32, #tpu.memory_space<vmem>>, vector<32x8xf32>,
    return
  }
  func.func @transform_0(%arg0: i32) -> (i32, i32) {
    %c0_i32 = arith.constant 0 : i32
    %c0_i32_0 = arith.constant 0 : i32
    %c0_i32_1 = arith.constant 0 : i32
    return %c0_i32, %c0_i32_0 : i32, i32
  }
  func.func @transform_1(%arg0: i32) -> (i32, i32) {
    %c0_i32 = arith.constant 0 : i32
    %c0_i32_0 = arith.constant 0 : i32
    %c0_i32_1 = arith.constant 0 : i32
    return %c0_i32, %c0_i32_0 : i32, i32
  }
  func.func @transform_2(%arg0: i32) -> (i32, i32) {
    %c0_i32 = arith.constant 0 : i32
    %c0_i32_0 = arith.constant 0 : i32
    %c0_i32_1 = arith.constant 0 : i32
    return %c0_i32, %c0_i32_0 : i32, i32
  }
  func.func @transform_3(%arg0: i32) -> (i32, i32) {
    %c0_i32 = arith.constant 0 : i32
    %c0_i32_0 = arith.constant 0 : i32
    return %c0_i32, %arg0 : i32, i32
  }
  func.func @transform_4(%arg0: i32) -> (i32, i32) {
    %c0_i32 = arith.constant 0 : i32
    %c0_i32_0 = arith.constant 0 : i32
    return %c0_i32, %arg0 : i32, i32
  }
  func.func @transform_5(%arg0: i32) -> (i32, i32) {
    %c0_i32 = arith.constant 0 : i32
    %c0_i32_0 = arith.constant 0 : i32
    return %c0_i32, %arg0 : i32, i32
  }
}

</mosaic_0001>

<llo_original>
// kernel: tpu_custom_call.1
$region0: #{tpu_custom_call.1}
  #allocation0 [shape = 'u32[]', space=smem, size = 0x4, offset = 0x4, fixed_abs, tag = 'smem constant byte address 0x4 - core index']
  #allocation1 [shape = 'u32[144,128]{1,0:T(1,128)}', space=vmem, size = 0x12000, scoped, tag = 'internal scratch']
  %s0 = inlined_call_operand.vmem [shape: f32[32,32], index: 0, kind: input, shape index: {}]
  %s1 = inlined_call_operand.vmem [shape: f32[32,16], index: 1, kind: input, shape index: {}]
  %s2 = inlined_call_operand.vmem [shape: f32[32,1], index: 2, kind: input, shape index: {}]
  %s3 = inlined_call_operand.vmem [shape: f32[32,8], index: 3, kind: input, shape index: {}]
  %s4 = inlined_call_operand.vmem [shape: f32[16,8], index: 4, kind: input, shape index: {}]
  %s5 = inlined_call_operand.vmem [shape: f32[32,8], index: 5, kind: output, shape index: {}]
  %s6 = sld [smem:[#allocation0]]
  $region30: #{tpu_custom_call.1} parent=0
    _
  %s8 = ssub.s32 1, %s6
  %s9 = scalar_select 0, %s8, %s6
  // Predicated region
  $region2: #{tpu_custom_call.1} parent=0 // pred_check
    _
  $region3: #{tpu_custom_call.1} parent=0 // pred_check_branch
    %11 = sbr.rel (0) target = $region5
  $region4: #{tpu_custom_call.1} parent=0 // pred_region
    _
  $region5: #{tpu_custom_call.1} parent=0 // pred_fallthru
    _
  // Predicated region
  $region6: #{tpu_custom_call.1} parent=0 // pred_check
    _
  $region7: #{tpu_custom_call.1} parent=0 // pred_check_branch
    %13 = sbr.rel (0) target = $region9
  $region8: #{tpu_custom_call.1} parent=0 // pred_region
    _
  $region9: #{tpu_custom_call.1} parent=0 // pred_fallthru
    _
  // Predicated region
  $region10: #{tpu_custom_call.1} parent=0 // pred_check
    _
  $region11: #{tpu_custom_call.1} parent=0 // pred_check_branch
    %15 = sbr.rel (0) target = $region13
  $region12: #{tpu_custom_call.1} parent=0 // pred_region
    _
  $region13: #{tpu_custom_call.1} parent=0 // pred_fallthru
    _
  // Predicated region
  $region14: #{tpu_custom_call.1} parent=0 // pred_check
    _
  $region15: #{tpu_custom_call.1} parent=0 // pred_check_branch
    %17 = sbr.rel (0) target = $region17
  $region16: #{tpu_custom_call.1} parent=0 // pred_region
    _
  $region17: #{tpu_custom_call.1} parent=0 // pred_fallthru
    _
  // Predicated region
  $region18: #{tpu_custom_call.1} parent=0 // pred_check
    _
  $region19: #{tpu_custom_call.1} parent=0 // pred_check_branch
    %19 = sbr.rel (0) target = $region21
  $region20: #{tpu_custom_call.1} parent=0 // pred_region
    _
  $region21: #{tpu_custom_call.1} parent=0 // pred_fallthru
    _
  %v20 = vld [vmem:[%s0] sm:$0xff]
  %v21 = vld [vmem:[%s0 + $0x8] sm:$0xff]
  %v22 = vld [vmem:[%s0 + $0x10] sm:$0xff]
  %v23 = vld [vmem:[%s0 + $0x18] sm:$0xff]
  %v24 = vld [vmem:[%s3] sm:$0xff]
  %v25 = vld [vmem:[%s3 + $0x8] sm:$0xff]
  %v26 = vld [vmem:[%s3 + $0x10] sm:$0xff]
  %v27 = vld [vmem:[%s3 + $0x18] sm:$0xff]
  %v28 = vld [vmem:[%s1] sm:$0xff]
  %v29 = vld [vmem:[%s1 + $0x8] sm:$0xff]
  %v30 = vld [vmem:[%s1 + $0x10] sm:$0xff]
  %v31 = vld [vmem:[%s1 + $0x18] sm:$0xff]
  %v32 = vld [vmem:[%s4] sm:$0xff]
  %v33 = vld [vmem:[%s4 + $0x8] sm:$0xff]
  %vm34 = vcmask 130048
  %v36 = vsel %vm34, %v28, 0
  %v39 = vsel %vm34, %v29, 0
  %v42 = vsel %vm34, %v30, 0
  %v45 = vsel %vm34, %v31, 0
  %47 = vmatprep.subr.mxu0 0.0
  %48 = vmatpush1.msra.mxu0 0.0
  %49 = vmatprep.subr.mxu0 0.0
  %50 = vmatpush1.msra.mxu0 0.0
  %51 = vmatprep.subr.mxu0 0.0
  %52 = vmatpush1.msra.mxu0 0.0
  %53 = vmatprep.subr.mxu0 0.0
  %54 = vmatpush1.msra.mxu0 0.0
  %55 = vmatprep.subr.mxu0 0.0
  %56 = vmatpush1.msra.mxu0 0.0
  %57 = vmatprep.subr.mxu0 0.0
  %58 = vmatpush1.msra.mxu0 0.0
  %59 = vmatprep.subr.mxu0 0.0
  %60 = vmatpush1.msra.mxu0 0.0
  %61 = vmatprep.subr.mxu0 0.0
  %62 = vmatpush1.msra.mxu0 0.0
  %63 = vmatprep.subr.mxu0 0.0
  %64 = vmatpush1.msra.mxu0 0.0
  %65 = vmatprep.subr.mxu0 0.0
  %66 = vmatpush1.msra.mxu0 0.0
  %67 = vmatprep.subr.mxu0 0.0
  %68 = vmatpush1.msra.mxu0 0.0
  %69 = vmatprep.subr.mxu0 0.0
  %70 = vmatpush1.msra.mxu0 0.0
  %71 = vmatprep.subr.mxu0 0.0
  %72 = vmatpush1.msra.mxu0 0.0
  %73 = vmatprep.subr.mxu0 0.0
  %74 = vmatpush1.msra.mxu0 0.0
  %75 = vmatprep.subr.mxu0 0.0
  %76 = vmatpush1.msra.mxu0 %v33
  %77 = vmatprep.subr.mxu0 0.0
  %78 = vmatpush1.msra.mxu0 %v32
  %79 = vmatprep.subr.mxu0 0.0
  %80 = vmatpush2.msra.mxu0 0.0
  %81 = vmatprep.subr.mxu0 0.0
  %82 = vmatpush2.msra.mxu0 0.0
  %83 = vmatprep.subr.mxu0 0.0
  %84 = vmatpush2.msra.mxu0 0.0
  %85 = vmatprep.subr.mxu0 0.0
  %86 = vmatpush2.msra.mxu0 0.0
  %87 = vmatprep.subr.mxu0 0.0
  %88 = vmatpush2.msra.mxu0 0.0
  %89 = vmatprep.subr.mxu0 0.0
  %90 = vmatpush2.msra.mxu0 0.0
  %91 = vmatprep.subr.mxu0 0.0
  %92 = vmatpush2.msra.mxu0 0.0
  %93 = vmatprep.subr.mxu0 0.0
  %94 = vmatpush2.msra.mxu0 0.0
  %95 = vmatprep.subr.mxu0 0.0
  %96 = vmatpush2.msra.mxu0 0.0
  %97 = vmatprep.subr.mxu0 0.0
  %98 = vmatpush2.msra.mxu0 0.0
  %99 = vmatprep.subr.mxu0 0.0
  %100 = vmatpush2.msra.mxu0 0.0
  %101 = vmatprep.subr.mxu0 0.0
  %102 = vmatpush2.msra.mxu0 0.0
  %103 = vmatprep.subr.mxu0 0.0
  %104 = vmatpush2.msra.mxu0 0.0
  %105 = vmatprep.subr.mxu0 0.0
  %106 = vmatpush2.msra.mxu0 0.0
  %107 = vmatprep.subr.mxu0 0.0
  %108 = vmatpush2.msra.mxu0 0.0
  %109 = vmatprep.subr.mxu0 0.0
  %110 = vmatpush2.msra.mxu0 0.0
  %111 = vmatprep.mubr.f32.mxu0 0.0
  %112 = vmatmul.mubr.f32.gmra.mxu0 %v36
  %v113 = vpop.f32.mrf.mxu0
  %v114 = vadd.f32 0.0, %v113
  %v115 = vpop.f32.mrf.mxu0
  %116 = vmatprep.mubr.f32.mxu0 0.0
  %117 = vmatmul.mubr.f32.gmra.mxu0 %v39
  %v118 = vpop.f32.mrf.mxu0
  %v119 = vadd.f32 0.0, %v118
  %v120 = vpop.f32.mrf.mxu0
  %121 = vmatprep.mubr.f32.mxu0 0.0
  %122 = vmatmul.mubr.f32.gmra.mxu0 %v42
  %v123 = vpop.f32.mrf.mxu0
  %v124 = vadd.f32 0.0, %v123
  %v125 = vpop.f32.mrf.mxu0
  %126 = vmatprep.mubr.f32.mxu0 0.0
  %127 = vmatmul.mubr.f32.gmra.mxu0 %v45
  %v128 = vpop.f32.mrf.mxu0
  %v129 = vadd.f32 0.0, %v128
  %v130 = vpop.f32.mrf.mxu0
  %131 = vdwg.mxu0
  %vm132 = vcmask 261120
  %v134 = vsel %vm132, %v20, 0
  %v137 = vsel %vm132, %v21, 0
  %v140 = vsel %vm132, %v22, 0
  %v143 = vsel %vm132, %v23, 0
  %145 = vmatprep.subr.mxu0 0.0
  %146 = vmatpush1.msra.mxu0 0.0
  %147 = vmatprep.subr.mxu0 0.0
  %148 = vmatpush1.msra.mxu0 0.0
  %149 = vmatprep.subr.mxu0 0.0
  %150 = vmatpush1.msra.mxu0 0.0
  %151 = vmatprep.subr.mxu0 0.0
  %152 = vmatpush1.msra.mxu0 0.0
  %153 = vmatprep.subr.mxu0 0.0
  %154 = vmatpush1.msra.mxu0 0.0
  %155 = vmatprep.subr.mxu0 0.0
  %156 = vmatpush1.msra.mxu0 0.0
  %157 = vmatprep.subr.mxu0 0.0
  %158 = vmatpush1.msra.mxu0 0.0
  %159 = vmatprep.subr.mxu0 0.0
  %160 = vmatpush1.msra.mxu0 0.0
  %161 = vmatprep.subr.mxu0 0.0
  %162 = vmatpush1.msra.mxu0 0.0
  %163 = vmatprep.subr.mxu0 0.0
  %164 = vmatpush1.msra.mxu0 0.0
  %165 = vmatprep.subr.mxu0 0.0
  %166 = vmatpush1.msra.mxu0 0.0
  %167 = vmatprep.subr.mxu0 0.0
  %168 = vmatpush1.msra.mxu0 0.0
  %169 = vmatprep.subr.mxu0 0.0
  %170 = vmatpush1.msra.mxu0 %v27
  %171 = vmatprep.subr.mxu0 0.0
  %172 = vmatpush1.msra.mxu0 %v26
  %173 = vmatprep.subr.mxu0 0.0
  %174 = vmatpush1.msra.mxu0 %v25
  %175 = vmatprep.subr.mxu0 0.0
  %176 = vmatpush1.msra.mxu0 %v24
  %177 = vmatprep.subr.mxu0 0.0
  %178 = vmatpush2.msra.mxu0 0.0
  %179 = vmatprep.subr.mxu0 0.0
  %180 = vmatpush2.msra.mxu0 0.0
  %181 = vmatprep.subr.mxu0 0.0
  %182 = vmatpush2.msra.mxu0 0.0
  %183 = vmatprep.subr.mxu0 0.0
  %184 = vmatpush2.msra.mxu0 0.0
  %185 = vmatprep.subr.mxu0 0.0
  %186 = vmatpush2.msra.mxu0 0.0
  %187 = vmatprep.subr.mxu0 0.0
  %188 = vmatpush2.msra.mxu0 0.0
  %189 = vmatprep.subr.mxu0 0.0
  %190 = vmatpush2.msra.mxu0 0.0
  %191 = vmatprep.subr.mxu0 0.0
  %192 = vmatpush2.msra.mxu0 0.0
  %193 = vmatprep.subr.mxu0 0.0
  %194 = vmatpush2.msra.mxu0 0.0
  %195 = vmatprep.subr.mxu0 0.0
  %196 = vmatpush2.msra.mxu0 0.0
  %197 = vmatprep.subr.mxu0 0.0
  %198 = vmatpush2.msra.mxu0 0.0
  %199 = vmatprep.subr.mxu0 0.0
  %200 = vmatpush2.msra.mxu0 0.0
  %201 = vmatprep.subr.mxu0 0.0
  %202 = vmatpush2.msra.mxu0 0.0
  %203 = vmatprep.subr.mxu0 0.0
  %204 = vmatpush2.msra.mxu0 0.0
  %205 = vmatprep.subr.mxu0 0.0
  %206 = vmatpush2.msra.mxu0 0.0
  %207 = vmatprep.subr.mxu0 0.0
  %208 = vmatpush2.msra.mxu0 0.0
  %209 = vmatprep.mubr.f32.mxu0 0.0
  %210 = vmatmul.mubr.f32.gmra.mxu0 %v134
  %v211 = vpop.f32.mrf.mxu0
  %v212 = vadd.f32 %v114, %v211
  %v213 = vpop.f32.mrf.mxu0
  %214 = vmatprep.mubr.f32.mxu0 0.0
  %215 = vmatmul.mubr.f32.gmra.mxu0 %v137
  %v216 = vpop.f32.mrf.mxu0
  %v217 = vadd.f32 %v119, %v216
  %v218 = vpop.f32.mrf.mxu0
  %219 = vmatprep.mubr.f32.mxu0 0.0
  %220 = vmatmul.mubr.f32.gmra.mxu0 %v140
  %v221 = vpop.f32.mrf.mxu0
  %v222 = vadd.f32 %v124, %v221
  %v223 = vpop.f32.mrf.mxu0
  %224 = vmatprep.mubr.f32.mxu0 0.0
  %225 = vmatmul.mubr.f32.gmra.mxu0 %v143
  %v226 = vpop.f32.mrf.mxu0
  %v227 = vadd.f32 %v129, %v226
  %v228 = vpop.f32.mrf.mxu0
  %229 = vdwg.mxu0
  %v230 = vld [vmem:[%s2] sm:$0xff]
  %v231 = vld [vmem:[%s2 + $0x8] sm:$0xff]
  %v232 = vld [vmem:[%s2 + $0x10] sm:$0xff]
  %v233 = vld [vmem:[%s2 + $0x18] sm:$0xff]
  %235 = vset.pattern.permute.xlu0 0
  %236 = vperm.xlu0 %235, %v230
  %v237 = vpop.permute.xlu0 %236
  %240 = vset.pattern.permute.xlu0 0
  %241 = vperm.xlu0 %240, %v231
  %v242 = vpop.permute.xlu0 %241
  %245 = vset.pattern.permute.xlu0 0
  %246 = vperm.xlu0 %245, %v232
  %v247 = vpop.permute.xlu0 %246
  %250 = vset.pattern.permute.xlu0 0
  %251 = vperm.xlu0 %250, %v233
  %v252 = vpop.permute.xlu0 %251
  %v254 = vadd.f32 %v212, %v237
  %v255 = vadd.f32 %v217, %v242
  %v256 = vadd.f32 %v222, %v247
  %v257 = vadd.f32 %v227, %v252
  %vm258 = vcmask 64512
  %259 = vst.msk [vmem:[%s5] sm:$0xff] %vm258, %v254
  %260 = vst.msk [vmem:[%s5 + $0x8] sm:$0xff] %vm258, %v255
  %261 = vst.msk [vmem:[%s5 + $0x10] sm:$0xff] %vm258, %v256
  %262 = vst.msk [vmem:[%s5 + $0x18] sm:$0xff] %vm258, %v257
  // Predicated region
  $region22: #{tpu_custom_call.1} parent=0 // pred_check
    _
  $region23: #{tpu_custom_call.1} parent=0 // pred_check_branch
    %264 = sbr.rel (0) target = $region25
  $region24: #{tpu_custom_call.1} parent=0 // pred_region
    _
  $region25: #{tpu_custom_call.1} parent=0 // pred_fallthru
    _
  // Predicated region
  $region26: #{tpu_custom_call.1} parent=0 // pred_check
    _
  $region27: #{tpu_custom_call.1} parent=0 // pred_check_branch
    %266 = sbr.rel (0) target = $region29
  $region28: #{tpu_custom_call.1} parent=0 // pred_region
    _
  $region29: #{tpu_custom_call.1} parent=0 // pred_fallthru
    _

</llo_original>
